<compile_context>
chip_gen: v6e
topology: v6e:2x2x1
jax: 0.10.0
libtpu: 0.0.40
codegen_flags: <defaults>
</compile_context>

<pallas_src>
import math

import jax
import jax.numpy as jnp
from jax import lax
from jax.experimental import pallas as pl
from jax.experimental.pallas import tpu as pltpu


# bf16 MXU operands with f32 accumulation (full MXU rate on all generations).
COMPUTE_DTYPE = jnp.bfloat16


def _round_up(x, m):
    return ((x + m - 1) // m) * m


def _make_kernel(compute_dtype):
    def kernel(ids_ref, emb_ref, w_ref, b_ref, o_ref):
        # ids_ref : VMEM (TM, 1)  int32          token ids for this tile
        # emb_ref : VMEM (V, E)   compute_dtype  embedding table (resident)
        # w_ref   : VMEM (E, Hp)  compute_dtype  linear.weight.T (resident)
        # b_ref   : VMEM (1, Hp)  float32        linear.bias
        # o_ref   : VMEM (TM, Hp) float32        output tile
        tm = o_ref.shape[0]
        v = emb_ref.shape[0]

        # ---- embedding gather as one MXU matmul (no serial row copies) ----
        ids = ids_ref[...]                                       # (TM, 1)
        col = lax.broadcasted_iota(jnp.int32, (tm, v), 1)        # (TM, V)
        onehot = (ids == col).astype(compute_dtype)              # (TM, V)
        gathered = jnp.dot(onehot, emb_ref[...],
                           preferred_element_type=jnp.float32)   # (TM, E) f32

        # ---- fused linear: (TM, E) @ (E, Hp) + b on the MXU ----
        y = jnp.dot(gathered.astype(compute_dtype), w_ref[...],
                    preferred_element_type=jnp.float32)          # (TM, Hp) f32
        o_ref[...] = (y + b_ref[...]).astype(o_ref.dtype)

    return kernel


def qus_embedding_map(qus, params, *, tile_tokens=256, compute_dtype=COMPUTE_DTYPE):
    """qus: (B, L) int32 token ids. Returns (B, L, hidden_size) float32."""
    emb = params["embedding"]            # (V, E) f32
    w = params["w"]                      # (E, H) f32 == linear.weight.T
    b = params["b"]                      # (H,)   f32
    V, E = emb.shape
    H = w.shape[1]
    B, L = qus.shape
    N = B * L

    # Lane-dense output: pad hidden to a multiple of 128 (unmasked stores).
    Hp = _round_up(H, 128)
    if Hp != H:
        w = jnp.pad(w, ((0, 0), (0, Hp - H)))
        b = jnp.pad(b, (0, Hp - H))

    # Pre-cast matmul operands once in the wrapper (no per-step in-kernel cast).
    emb_c = emb.astype(compute_dtype)
    w_c = w.astype(compute_dtype)
    b2 = b.reshape(1, Hp).astype(jnp.float32)    # rank-2: matches its BlockSpec

    # Flatten ids; pad the tiny id vector so the token axis tiles evenly.
    ids = qus.reshape(N, 1).astype(jnp.int32)
    TM = min(_round_up(tile_tokens, 8), _round_up(N, 8))
    NP = _round_up(N, TM)
    if NP != N:
        ids = jnp.pad(ids, ((0, NP - N), (0, 0)))  # padded rows sliced off below

    # Explicit VMEM budget (double-buffered constants + per-step IO + onehot),
    # capped at 64 MiB so it also fits a single v7x TensorCore.
    itemsize = jnp.dtype(compute_dtype).itemsize
    resident_bytes = V * E * itemsize + E * Hp * itemsize + Hp * 4
    per_step_bytes = TM * 4 + TM * Hp * 4 + TM * V * itemsize + TM * E * 4
    vmem_limit = int(min(64 * 2**20,
                         max(32 * 2**20, 4 * (resident_bytes + per_step_bytes))))

    out = pl.pallas_call(
        _make_kernel(compute_dtype),
        out_shape=jax.ShapeDtypeStruct((NP, Hp), jnp.float32),
        grid=(NP // TM,),
        in_specs=[
            pl.BlockSpec((TM, 1), lambda i: (i, 0)),    # ids tile
            pl.BlockSpec((V, E), lambda i: (0, 0)),     # embedding table (resident)
            pl.BlockSpec((E, Hp), lambda i: (0, 0)),    # weight (resident)
            pl.BlockSpec((1, Hp), lambda i: (0, 0)),    # bias (resident)
        ],
        out_specs=pl.BlockSpec((TM, Hp), lambda i: (i, 0)),
        compiler_params=pltpu.CompilerParams(
            dimension_semantics=("parallel",),
            vmem_limit_bytes=vmem_limit),
    )(ids, emb_c, w_c, b2)

    if NP != N or Hp != H:
        out = out[:N, :H]
    return out.reshape(B, L, H)


def init_params(key, word_size, embedding_dim, hidden_size):
    # TODO(synk): PyTorch loads GloVe vectors from `glove_path`; no file I/O
    # here, so the embedding table is randomly initialized instead.
    k1, k2, k3 = jax.random.split(key, 3)
    bound = 1.0 / math.sqrt(embedding_dim)
    return {
        "embedding": 0.6 * jax.random.normal(
            k1, (word_size, embedding_dim), jnp.float32),
        # nn.Linear(embedding_dim, hidden_size), stored pre-transposed (E, H)
        "w": jax.random.uniform(k2, (embedding_dim, hidden_size),
                                jnp.float32, -bound, bound),
        "b": jax.random.uniform(k3, (hidden_size,),
                                jnp.float32, -bound, bound),
    }


def reference_forward(qus, params):
    """Pure-JAX f32 reference mirroring the PyTorch forward."""
    emb = params["embedding"][qus]                      # (B, L, E) gather
    y = jnp.einsum("ble,eh->blh", emb, params["w"],
                   precision=jax.lax.Precision.HIGHEST)
    return y + params["b"]


if __name__ == "__main__":
    B, L = 2, 8                      # batch=2, seq=8
    V, E, H = 512, 64, 128           # word_size, embedding_dim, hidden_size
    key = jax.random.PRNGKey(0)
    kq, kp = jax.random.split(key)
    qus = jax.random.randint(kq, (B, L), 0, V, dtype=jnp.int32)
    params = init_params(kp, V, E, H)

    out = jax.block_until_ready(qus_embedding_map(qus, params))
    ref = jax.block_until_ready(reference_forward(qus, params))

    assert out.shape == (B, L, H)
    err = float(jnp.max(jnp.abs(out - ref)))
    # bf16 MXU operands (f32 accumulation) vs f32 reference -> loosened tolerance.
    assert jnp.allclose(out, ref, atol=3e-2, rtol=3e-2), f"max err {err}"
    print("KERNEL_OK")
</pallas_src>

<mosaic_0001>
module attributes {stable_mosaic.version = 11 : i64} {
  func.func @kernel(%arg0: i32, %arg1: memref<16x1xi32, #tpu.memory_space<vmem>>, %arg2: memref<512x64xbf16, #tpu.memory_space<vmem>>, %arg3: memref<64x128xbf16, #tpu.memory_space<vmem>>, %arg4: memref<1x128xf32, #tpu.memory_space<vmem>>, %arg5: memref<16x128xf32, #tpu.memory_space<vmem>>) attributes {dimension_semantics = [#tpu.dimension_semantics<parallel>], iteration_bounds = array<i64: 1>, scalar_prefetch = 0 : i64, scratch_operands = 0 : i64, tpu.core_type = #tpu.core_type<tc>, window_params = [{transform_indices = @transform_0, window_bounds = array<i64: 16, 1>}, {pipeline_mode = #tpu.pipeline_mode<synchronous>, transform_indices = @transform_1, window_bounds = array<i64: 512, 64>}, {pipeline_mode = #tpu.pipeline_mode<synchronous>, transform_indices = @transform_2, window_bounds = array<i64: 64, 128>}, {pipeline_mode = #tpu.pipeline_mode<synchronous>, transform_indices = @transform_3, window_bounds = array<i64: 1, 128>}, {transform_indices = @transform_4, window_bounds = array<i64: 16, 128>}]} {
    %c0 = arith.constant 0 : index
    %c0_0 = arith.constant 0 : index
    %0 = vector.load %arg1[%c0, %c0_0] : memref<16x1xi32, #tpu.memory_space<vmem>>, vector<16x1xi32>
    %1 = tpu.iota {dimensions = array<i32: 1>} : vector<16x512xi32>
    %2 = vector.broadcast %0 : vector<16x1xi32> to vector<16x512xi32>
    %3 = arith.cmpi eq, %2, %1 : vector<16x512xi32>
    %4 = arith.extui %3 : vector<16x512xi1> to vector<16x512xi32>
    %5 = arith.sitofp %4 : vector<16x512xi32> to vector<16x512xf32>
    %6 = arith.truncf %5 : vector<16x512xf32> to vector<16x512xbf16>
    %c0_1 = arith.constant 0 : index
    %c0_2 = arith.constant 0 : index
    %7 = vector.load %arg2[%c0_1, %c0_2] : memref<512x64xbf16, #tpu.memory_space<vmem>>, vector<512x64xbf16>
    %cst = arith.constant dense<0.000000e+00> : vector<16x64xf32>
    %8 = tpu.matmul %6, %7, %cst {dimension_numbers = #tpu.dot_dimension_numbers<[1], [0], [0], [1], [0, 0, 1, 1], [], []>} : vector<16x512xbf16>, vector<512x64xbf16>, vector<16x64xf32> -> vector<16x64xf32>
    %9 = arith.truncf %8 : vector<16x64xf32> to vector<16x64xbf16>
    %c0_3 = arith.constant 0 : index
    %c0_4 = arith.constant 0 : index
    %10 = vector.load %arg3[%c0_3, %c0_4] : memref<64x128xbf16, #tpu.memory_space<vmem>>, vector<64x128xbf16>
    %cst_5 = arith.constant dense<0.000000e+00> : vector<16x128xf32>
    %11 = tpu.matmul %9, %10, %cst_5 {dimension_numbers = #tpu.dot_dimension_numbers<[1], [0], [0], [1], [0, 0, 1, 1], [], []>} : vector<16x64xbf16>, vector<64x128xbf16>, vector<16x128xf32> -> vector<16x128xf32>
    %c0_6 = arith.constant 0 : index
    %c0_7 = arith.constant 0 : index
    %12 = vector.load %arg4[%c0_6, %c0_7] : memref<1x128xf32, #tpu.memory_space<vmem>>, vector<1x128xf32>
    %13 = vector.broadcast %12 : vector<1x128xf32> to vector<16x128xf32>
    %14 = arith.addf %11, %13 : vector<16x128xf32>
    %c0_8 = arith.constant 0 : index
    %c0_9 = arith.constant 0 : index
    %15 = vector.load %arg5[%c0_8, %c0_9] : memref<16x128xf32, #tpu.memory_space<vmem>>, vector<16x128xf32>
    tpu.vector_store %arg5[%c0_8, %c0_9], %14 {strides = array<i32>} : memref<16x128xf32, #tpu.memory_space<vmem>>, vector<16x128xf32>,
    return
  }
  func.func @transform_0(%arg0: i32) -> (i32, i32) {
    %c0_i32 = arith.constant 0 : i32
    %c0_i32_0 = arith.constant 0 : i32
    return %arg0, %c0_i32 : i32, i32
  }
  func.func @transform_1(%arg0: i32) -> (i32, i32) {
    %c0_i32 = arith.constant 0 : i32
    %c0_i32_0 = arith.constant 0 : i32
    %c0_i32_1 = arith.constant 0 : i32
    return %c0_i32, %c0_i32_0 : i32, i32
  }
  func.func @transform_2(%arg0: i32) -> (i32, i32) {
    %c0_i32 = arith.constant 0 : i32
    %c0_i32_0 = arith.constant 0 : i32
    %c0_i32_1 = arith.constant 0 : i32
    return %c0_i32, %c0_i32_0 : i32, i32
  }
  func.func @transform_3(%arg0: i32) -> (i32, i32) {
    %c0_i32 = arith.constant 0 : i32
    %c0_i32_0 = arith.constant 0 : i32
    %c0_i32_1 = arith.constant 0 : i32
    return %c0_i32, %c0_i32_0 : i32, i32
  }
  func.func @transform_4(%arg0: i32) -> (i32, i32) {
    %c0_i32 = arith.constant 0 : i32
    %c0_i32_0 = arith.constant 0 : i32
    return %arg0, %c0_i32 : i32, i32
  }
}

</mosaic_0001>

<llo_original>
// kernel: tpu_custom_call.1
$region0: #{tpu_custom_call.1}
  #allocation0 [shape = 'u32[]', space=smem, size = 0x4, offset = 0x4, fixed_abs, tag = 'smem constant byte address 0x4 - core index']
  #allocation1 [shape = 'u32[144,128]{1,0:T(1,128)}', space=vmem, size = 0x12000, scoped, tag = 'internal scratch']
  %s0 = inlined_call_operand.vmem [shape: s32[16,1], index: 0, kind: input, shape index: {}]
  %s1 = inlined_call_operand.vmem [shape: bf16[512,64], index: 1, kind: input, shape index: {}]
  %s2 = inlined_call_operand.vmem [shape: bf16[64,128], index: 2, kind: input, shape index: {}]
  %s3 = inlined_call_operand.vmem [shape: f32[1,128], index: 3, kind: input, shape index: {}]
  %s4 = inlined_call_operand.hbm [shape: f32[16,128], index: 4, kind: output, shape index: {}]
  %s5 = sld [smem:[#allocation0]]
  $region26: #{tpu_custom_call.1} parent=0
    _
  %s7 = ssub.s32 1, %s5
  %s8 = scalar_select 0, %s7, %s5
  $region1: #{tpu_custom_call.1} parent=0
    #allocation2 [shape = 'u8[8192]{0}', space=vmem, size = 0x2000, scoped, tag = 'output window, operand 0, single buffered']
    #allocation3 [shape = 's32[1]{0}', space=sflag, size = 0x4, scoped, tag = 'scoped memory for tpu_custom_call.1']
    %9 = vsyncpa [#allocation3], 0
    // Predicated region
    $region2: #{tpu_custom_call.1} parent=1 // pred_check
      _
    $region3: #{tpu_custom_call.1} parent=1 // pred_check_branch
      %11 = sbr.rel (0) target = $region5
    $region4: #{tpu_custom_call.1} parent=1 // pred_region
      _
    $region5: #{tpu_custom_call.1} parent=1 // pred_fallthru
      _
    // Predicated region
    $region6: #{tpu_custom_call.1} parent=1 // pred_check
      _
    $region7: #{tpu_custom_call.1} parent=1 // pred_check_branch
      %13 = sbr.rel (0) target = $region9
    $region8: #{tpu_custom_call.1} parent=1 // pred_region
      _
    $region9: #{tpu_custom_call.1} parent=1 // pred_fallthru
      _
    // Predicated region
    $region10: #{tpu_custom_call.1} parent=1 // pred_check
      _
    $region11: #{tpu_custom_call.1} parent=1 // pred_check_branch
      %15 = sbr.rel (0) target = $region13
    $region12: #{tpu_custom_call.1} parent=1 // pred_region
      _
    $region13: #{tpu_custom_call.1} parent=1 // pred_fallthru
      _
    // Predicated region
    $region14: #{tpu_custom_call.1} parent=1 // pred_check
      _
    $region15: #{tpu_custom_call.1} parent=1 // pred_check_branch
      %17 = sbr.rel (0) target = $region17
    $region16: #{tpu_custom_call.1} parent=1 // pred_region
      _
    $region17: #{tpu_custom_call.1} parent=1 // pred_fallthru
      _
    %v19 = vld [vmem:[%s0] sm:$0xff]
    %v20 = vld [vmem:[%s0 + $0x8] sm:$0xff]
    %v21 = vlaneseq
    %v22 = vand.u32 %v21, 127
    %v23 = vadd.s32 %v22, 128
    %v24 = vadd.s32 %v22, 256
    %v25 = vadd.s32 %v22, 384
    %26 = vset.pattern.permute.xlu0 0
    %27 = vperm.xlu0 %26, %v19
    %v28 = vpop.permute.xlu0 %27
    %29 = vset.pattern.permute.xlu0 0
    %30 = vperm.xlu0 %29, %v20
    %v31 = vpop.permute.xlu0 %30
    %vm32 = vcmp.eq.s32.totalorder %v28, %v22
    %vm33 = vcmp.eq.s32.totalorder %v28, %v23
    %vm34 = vcmp.eq.s32.totalorder %v28, %v24
    %vm35 = vcmp.eq.s32.totalorder %v28, %v25
    %vm36 = vcmp.eq.s32.totalorder %v31, %v22
    %vm37 = vcmp.eq.s32.totalorder %v31, %v23
    %vm38 = vcmp.eq.s32.totalorder %v31, %v24
    %vm39 = vcmp.eq.s32.totalorder %v31, %v25
    %v40 = vsel %vm32, 1, 0
    %v41 = vsel %vm33, 1, 0
    %v42 = vsel %vm34, 1, 0
    %v43 = vsel %vm35, 1, 0
    %v44 = vsel %vm36, 1, 0
    %v45 = vsel %vm37, 1, 0
    %v46 = vsel %vm38, 1, 0
    %v47 = vsel %vm39, 1, 0
    %v48 = vcvt.s32.f32 %v40
    %v49 = vcvt.s32.f32 %v41
    %v50 = vcvt.s32.f32 %v42
    %v51 = vcvt.s32.f32 %v43
    %v52 = vcvt.s32.f32 %v44
    %v53 = vcvt.s32.f32 %v45
    %v54 = vcvt.s32.f32 %v46
    %v55 = vcvt.s32.f32 %v47
    %v56 = vpack.c.bf16 %v52, %v48
    %v57 = vpack.c.bf16 %v53, %v49
    %v58 = vpack.c.bf16 %v54, %v50
    %v59 = vpack.c.bf16 %v55, %v51
    %v60 = vld [vmem:[%s1] sm:$0xf]
    %v61 = vld [vmem:[%s1 + $0x4] sm:$0xf]
    %v62 = vld [vmem:[%s1 + $0x8] sm:$0xf]
    %v63 = vld [vmem:[%s1 + $0xc] sm:$0xf]
    %v64 = vld [vmem:[%s1 + $0x10] sm:$0xf]
    %v65 = vld [vmem:[%s1 + $0x14] sm:$0xf]
    %v66 = vld [vmem:[%s1 + $0x18] sm:$0xf]
    %v67 = vld [vmem:[%s1 + $0x1c] sm:$0xf]
    %v68 = vld [vmem:[%s1 + $0x20] sm:$0xf]
    %v69 = vld [vmem:[%s1 + $0x24] sm:$0xf]
    %v70 = vld [vmem:[%s1 + $0x28] sm:$0xf]
    %v71 = vld [vmem:[%s1 + $0x2c] sm:$0xf]
    %v72 = vld [vmem:[%s1 + $0x30] sm:$0xf]
    %v73 = vld [vmem:[%s1 + $0x34] sm:$0xf]
    %v74 = vld [vmem:[%s1 + $0x38] sm:$0xf]
    %v75 = vld [vmem:[%s1 + $0x3c] sm:$0xf]
    %v76 = vld [vmem:[%s1 + $0x40] sm:$0xf]
    %v77 = vld [vmem:[%s1 + $0x44] sm:$0xf]
    %v78 = vld [vmem:[%s1 + $0x48] sm:$0xf]
    %v79 = vld [vmem:[%s1 + $0x4c] sm:$0xf]
    %v80 = vld [vmem:[%s1 + $0x50] sm:$0xf]
    %v81 = vld [vmem:[%s1 + $0x54] sm:$0xf]
    %v82 = vld [vmem:[%s1 + $0x58] sm:$0xf]
    %v83 = vld [vmem:[%s1 + $0x5c] sm:$0xf]
    %v84 = vld [vmem:[%s1 + $0x60] sm:$0xf]
    %v85 = vld [vmem:[%s1 + $0x64] sm:$0xf]
    %v86 = vld [vmem:[%s1 + $0x68] sm:$0xf]
    %v87 = vld [vmem:[%s1 + $0x6c] sm:$0xf]
    %v88 = vld [vmem:[%s1 + $0x70] sm:$0xf]
    %v89 = vld [vmem:[%s1 + $0x74] sm:$0xf]
    %v90 = vld [vmem:[%s1 + $0x78] sm:$0xf]
    %v91 = vld [vmem:[%s1 + $0x7c] sm:$0xf]
    %v92 = vld [vmem:[%s1 + $0x80] sm:$0xf]
    %v93 = vld [vmem:[%s1 + $0x84] sm:$0xf]
    %v94 = vld [vmem:[%s1 + $0x88] sm:$0xf]
    %v95 = vld [vmem:[%s1 + $0x8c] sm:$0xf]
    %v96 = vld [vmem:[%s1 + $0x90] sm:$0xf]
    %v97 = vld [vmem:[%s1 + $0x94] sm:$0xf]
    %v98 = vld [vmem:[%s1 + $0x98] sm:$0xf]
    %v99 = vld [vmem:[%s1 + $0x9c] sm:$0xf]
    %v100 = vld [vmem:[%s1 + $0xa0] sm:$0xf]
    %v101 = vld [vmem:[%s1 + $0xa4] sm:$0xf]
    %v102 = vld [vmem:[%s1 + $0xa8] sm:$0xf]
    %v103 = vld [vmem:[%s1 + $0xac] sm:$0xf]
    %v104 = vld [vmem:[%s1 + $0xb0] sm:$0xf]
    %v105 = vld [vmem:[%s1 + $0xb4] sm:$0xf]
    %v106 = vld [vmem:[%s1 + $0xb8] sm:$0xf]
    %v107 = vld [vmem:[%s1 + $0xbc] sm:$0xf]
    %v108 = vld [vmem:[%s1 + $0xc0] sm:$0xf]
    %v109 = vld [vmem:[%s1 + $0xc4] sm:$0xf]
    %v110 = vld [vmem:[%s1 + $0xc8] sm:$0xf]
    %v111 = vld [vmem:[%s1 + $0xcc] sm:$0xf]
    %v112 = vld [vmem:[%s1 + $0xd0] sm:$0xf]
    %v113 = vld [vmem:[%s1 + $0xd4] sm:$0xf]
    %v114 = vld [vmem:[%s1 + $0xd8] sm:$0xf]
    %v115 = vld [vmem:[%s1 + $0xdc] sm:$0xf]
    %v116 = vld [vmem:[%s1 + $0xe0] sm:$0xf]
    %v117 = vld [vmem:[%s1 + $0xe4] sm:$0xf]
    %v118 = vld [vmem:[%s1 + $0xe8] sm:$0xf]
    %v119 = vld [vmem:[%s1 + $0xec] sm:$0xf]
    %v120 = vld [vmem:[%s1 + $0xf0] sm:$0xf]
    %v121 = vld [vmem:[%s1 + $0xf4] sm:$0xf]
    %v122 = vld [vmem:[%s1 + $0xf8] sm:$0xf]
    %v123 = vld [vmem:[%s1 + $0xfc] sm:$0xf]
    %v188 = vunpack.c.l.b16 %v60
    %v189 = vunpack.c.l.b16 %v61
    %v190 = vunpack.c.l.b16 %v62
    %v191 = vunpack.c.l.b16 %v63
    %v192 = vunpack.c.l.b16 %v64
    %v193 = vunpack.c.l.b16 %v65
    %v194 = vunpack.c.l.b16 %v66
    %v195 = vunpack.c.l.b16 %v67
    %v196 = vunpack.c.l.b16 %v68
    %v197 = vunpack.c.l.b16 %v69
    %v198 = vunpack.c.l.b16 %v70
    %v199 = vunpack.c.l.b16 %v71
    %v200 = vunpack.c.l.b16 %v72
    %v201 = vunpack.c.l.b16 %v73
    %v202 = vunpack.c.l.b16 %v74
    %v203 = vunpack.c.l.b16 %v75
    %v204 = vunpack.c.l.b16 %v76
    %v205 = vunpack.c.l.b16 %v77
    %v206 = vunpack.c.l.b16 %v78
    %v207 = vunpack.c.l.b16 %v79
    %v208 = vunpack.c.l.b16 %v80
    %v209 = vunpack.c.l.b16 %v81
    %v210 = vunpack.c.l.b16 %v82
    %v211 = vunpack.c.l.b16 %v83
    %v212 = vunpack.c.l.b16 %v84
    %v213 = vunpack.c.l.b16 %v85
    %v214 = vunpack.c.l.b16 %v86
    %v215 = vunpack.c.l.b16 %v87
    %v216 = vunpack.c.l.b16 %v88
    %v217 = vunpack.c.l.b16 %v89
    %v218 = vunpack.c.l.b16 %v90
    %v219 = vunpack.c.l.b16 %v91
    %v220 = vunpack.c.l.b16 %v92
    %v221 = vunpack.c.l.b16 %v93
    %v222 = vunpack.c.l.b16 %v94
    %v223 = vunpack.c.l.b16 %v95
    %v224 = vunpack.c.l.b16 %v96
    %v225 = vunpack.c.l.b16 %v97
    %v226 = vunpack.c.l.b16 %v98
    %v227 = vunpack.c.l.b16 %v99
    %v228 = vunpack.c.l.b16 %v100
    %v229 = vunpack.c.l.b16 %v101
    %v230 = vunpack.c.l.b16 %v102
    %v231 = vunpack.c.l.b16 %v103
    %v232 = vunpack.c.l.b16 %v104
    %v233 = vunpack.c.l.b16 %v105
    %v234 = vunpack.c.l.b16 %v106
    %v235 = vunpack.c.l.b16 %v107
    %v236 = vunpack.c.l.b16 %v108
    %v237 = vunpack.c.l.b16 %v109
    %v238 = vunpack.c.l.b16 %v110
    %v239 = vunpack.c.l.b16 %v111
    %v240 = vunpack.c.l.b16 %v112
    %v241 = vunpack.c.l.b16 %v113
    %v242 = vunpack.c.l.b16 %v114
    %v243 = vunpack.c.l.b16 %v115
    %v244 = vunpack.c.l.b16 %v116
    %v245 = vunpack.c.l.b16 %v117
    %v246 = vunpack.c.l.b16 %v118
    %v247 = vunpack.c.l.b16 %v119
    %v248 = vunpack.c.l.b16 %v120
    %v249 = vunpack.c.l.b16 %v121
    %v250 = vunpack.c.l.b16 %v122
    %v251 = vunpack.c.l.b16 %v123
    %v252 = vpack.c.b16 %v189, %v188
    %v253 = vpack.c.b16 %v191, %v190
    %v254 = vpack.c.b16 %v193, %v192
    %v255 = vpack.c.b16 %v195, %v194
    %v256 = vpack.c.b16 %v197, %v196
    %v257 = vpack.c.b16 %v199, %v198
    %v258 = vpack.c.b16 %v201, %v200
    %v259 = vpack.c.b16 %v203, %v202
    %v260 = vpack.c.b16 %v205, %v204
    %v261 = vpack.c.b16 %v207, %v206
    %v262 = vpack.c.b16 %v209, %v208
    %v263 = vpack.c.b16 %v211, %v210
    %v264 = vpack.c.b16 %v213, %v212
    %v265 = vpack.c.b16 %v215, %v214
    %v266 = vpack.c.b16 %v217, %v216
    %v267 = vpack.c.b16 %v219, %v218
    %v268 = vpack.c.b16 %v221, %v220
    %v269 = vpack.c.b16 %v223, %v222
    %v270 = vpack.c.b16 %v225, %v224
    %v271 = vpack.c.b16 %v227, %v226
    %v272 = vpack.c.b16 %v229, %v228
    %v273 = vpack.c.b16 %v231, %v230
    %v274 = vpack.c.b16 %v233, %v232
    %v275 = vpack.c.b16 %v235, %v234
    %v276 = vpack.c.b16 %v237, %v236
    %v277 = vpack.c.b16 %v239, %v238
    %v278 = vpack.c.b16 %v241, %v240
    %v279 = vpack.c.b16 %v243, %v242
    %v280 = vpack.c.b16 %v245, %v244
    %v281 = vpack.c.b16 %v247, %v246
    %v282 = vpack.c.b16 %v249, %v248
    %v283 = vpack.c.b16 %v251, %v250
    %316 = vmatprep.subr.bf16.mxu0 0
    %317 = vmatpush1.bf16.msra.mxu0 %v259
    %318 = vmatprep.subr.bf16.mxu0 0
    %319 = vmatpush1.bf16.msra.mxu0 %v258
    %320 = vmatprep.subr.bf16.mxu0 0
    %321 = vmatpush1.bf16.msra.mxu0 %v257
    %322 = vmatprep.subr.bf16.mxu0 0
    %323 = vmatpush1.bf16.msra.mxu0 %v256
    %324 = vmatprep.subr.bf16.mxu0 0
    %325 = vmatpush1.bf16.msra.mxu0 %v255
    %326 = vmatprep.subr.bf16.mxu0 0
    %327 = vmatpush1.bf16.msra.mxu0 %v254
    %328 = vmatprep.subr.bf16.mxu0 0
    %329 = vmatpush1.bf16.msra.mxu0 %v253
    %330 = vmatprep.subr.bf16.mxu0 0
    %331 = vmatpush1.bf16.msra.mxu0 %v252
    %332 = vmatprep.subr.bf16.mxu0 0
    %333 = vmatpush2.bf16.msra.mxu0 %v267
    %334 = vmatprep.subr.bf16.mxu0 0
    %335 = vmatpush2.bf16.msra.mxu0 %v266
    %336 = vmatprep.subr.bf16.mxu0 0
    %337 = vmatpush2.bf16.msra.mxu0 %v265
    %338 = vmatprep.subr.bf16.mxu0 0
    %339 = vmatpush2.bf16.msra.mxu0 %v264
    %340 = vmatprep.subr.bf16.mxu0 0
    %341 = vmatpush2.bf16.msra.mxu0 %v263
    %342 = vmatprep.subr.bf16.mxu0 0
    %343 = vmatpush2.bf16.msra.mxu0 %v262
    %344 = vmatprep.subr.bf16.mxu0 0
    %345 = vmatpush2.bf16.msra.mxu0 %v261
    %346 = vmatprep.subr.bf16.mxu0 0
    %347 = vmatpush2.bf16.msra.mxu0 %v260
    %348 = vmatprep.mubr.bf16.mxu0 %v57
    %349 = vmatmul.mubr.bf16.gmra.mxu0 %v56
    %v350 = vpop.f32.mrf.mxu0
    %v351 = vadd.f32 0.0, %v350
    %v352 = vpop.f32.mrf.mxu0
    %v353 = vpop.f32.mrf.mxu0
    %v354 = vadd.f32 0.0, %v353
    %v355 = vpop.f32.mrf.mxu0
    %356 = vdwg.mxu0
    %357 = vmatprep.subr.bf16.mxu0 0
    %358 = vmatpush1.bf16.msra.mxu0 %v275
    %359 = vmatprep.subr.bf16.mxu0 0
    %360 = vmatpush1.bf16.msra.mxu0 %v274
    %361 = vmatprep.subr.bf16.mxu0 0
    %362 = vmatpush1.bf16.msra.mxu0 %v273
    %363 = vmatprep.subr.bf16.mxu0 0
    %364 = vmatpush1.bf16.msra.mxu0 %v272
    %365 = vmatprep.subr.bf16.mxu0 0
    %366 = vmatpush1.bf16.msra.mxu0 %v271
    %367 = vmatprep.subr.bf16.mxu0 0
    %368 = vmatpush1.bf16.msra.mxu0 %v270
    %369 = vmatprep.subr.bf16.mxu0 0
    %370 = vmatpush1.bf16.msra.mxu0 %v269
    %371 = vmatprep.subr.bf16.mxu0 0
    %372 = vmatpush1.bf16.msra.mxu0 %v268
    %373 = vmatprep.subr.bf16.mxu0 0
    %374 = vmatpush2.bf16.msra.mxu0 %v283
    %375 = vmatprep.subr.bf16.mxu0 0
    %376 = vmatpush2.bf16.msra.mxu0 %v282
    %377 = vmatprep.subr.bf16.mxu0 0
    %378 = vmatpush2.bf16.msra.mxu0 %v281
    %379 = vmatprep.subr.bf16.mxu0 0
    %380 = vmatpush2.bf16.msra.mxu0 %v280
    %381 = vmatprep.subr.bf16.mxu0 0
    %382 = vmatpush2.bf16.msra.mxu0 %v279
    %383 = vmatprep.subr.bf16.mxu0 0
    %384 = vmatpush2.bf16.msra.mxu0 %v278
    %385 = vmatprep.subr.bf16.mxu0 0
    %386 = vmatpush2.bf16.msra.mxu0 %v277
    %387 = vmatprep.subr.bf16.mxu0 0
    %388 = vmatpush2.bf16.msra.mxu0 %v276
    %389 = vmatprep.mubr.bf16.mxu0 %v59
    %390 = vmatmul.mubr.bf16.gmra.mxu0 %v58
    %v391 = vpop.f32.mrf.mxu0
    %v392 = vadd.f32 %v351, %v391
    %v393 = vpop.f32.mrf.mxu0
    %v394 = vpop.f32.mrf.mxu0
    %v395 = vadd.f32 %v354, %v394
    %v396 = vpop.f32.mrf.mxu0
    %397 = vdwg.mxu0
    %v398 = vpack.c.bf16 %v395, %v392
    %v399 = vld [vmem:[%s2] sm:$0xf]
    %v400 = vld [vmem:[%s2 + $0x4] sm:$0xf]
    %v401 = vld [vmem:[%s2 + $0x8] sm:$0xf]
    %v402 = vld [vmem:[%s2 + $0xc] sm:$0xf]
    %v403 = vld [vmem:[%s2 + $0x10] sm:$0xf]
    %v404 = vld [vmem:[%s2 + $0x14] sm:$0xf]
    %v405 = vld [vmem:[%s2 + $0x18] sm:$0xf]
    %v406 = vld [vmem:[%s2 + $0x1c] sm:$0xf]
    %v407 = vld [vmem:[%s3] sm:$0x1]
    %v409 = vlaneseq
    %v410 = vshrl.u32 %v409, 7
    %v411 = vsub.s32 0, %v410
    %v412 = vrot.slane %v407, %v411
    %v422 = vunpack.c.l.b16 %v399
    %v423 = vunpack.c.l.b16 %v400
    %v424 = vunpack.c.l.b16 %v401
    %v425 = vunpack.c.l.b16 %v402
    %v426 = vunpack.c.l.b16 %v403
    %v427 = vunpack.c.l.b16 %v404
    %v428 = vunpack.c.l.b16 %v405
    %v429 = vunpack.c.l.b16 %v406
    %v430 = vpack.c.b16 %v423, %v422
    %v431 = vpack.c.b16 %v425, %v424
    %v432 = vpack.c.b16 %v427, %v426
    %v433 = vpack.c.b16 %v429, %v428
    %vm438 = vcmask 523264
    %v440 = vsel %vm438, %v398, 0
    %442 = vmatprep.subr.bf16.mxu0 0
    %443 = vmatpush1.bf16.msra.mxu0 0
    %444 = vmatprep.subr.bf16.mxu0 0
    %445 = vmatpush1.bf16.msra.mxu0 0
    %446 = vmatprep.subr.bf16.mxu0 0
    %447 = vmatpush1.bf16.msra.mxu0 0
    %448 = vmatprep.subr.bf16.mxu0 0
    %449 = vmatpush1.bf16.msra.mxu0 0
    %450 = vmatprep.subr.bf16.mxu0 0
    %451 = vmatpush1.bf16.msra.mxu0 %v433
    %452 = vmatprep.subr.bf16.mxu0 0
    %453 = vmatpush1.bf16.msra.mxu0 %v432
    %454 = vmatprep.subr.bf16.mxu0 0
    %455 = vmatpush1.bf16.msra.mxu0 %v431
    %456 = vmatprep.subr.bf16.mxu0 0
    %457 = vmatpush1.bf16.msra.mxu0 %v430
    %458 = vmatprep.subr.bf16.mxu0 0
    %459 = vmatpush2.bf16.msra.mxu0 0
    %460 = vmatprep.subr.bf16.mxu0 0
    %461 = vmatpush2.bf16.msra.mxu0 0
    %462 = vmatprep.subr.bf16.mxu0 0
    %463 = vmatpush2.bf16.msra.mxu0 0
    %464 = vmatprep.subr.bf16.mxu0 0
    %465 = vmatpush2.bf16.msra.mxu0 0
    %466 = vmatprep.subr.bf16.mxu0 0
    %467 = vmatpush2.bf16.msra.mxu0 0
    %468 = vmatprep.subr.bf16.mxu0 0
    %469 = vmatpush2.bf16.msra.mxu0 0
    %470 = vmatprep.subr.bf16.mxu0 0
    %471 = vmatpush2.bf16.msra.mxu0 0
    %472 = vmatprep.subr.bf16.mxu0 0
    %473 = vmatpush2.bf16.msra.mxu0 0
    %474 = vmatprep.mubr.bf16.mxu0 0
    %475 = vmatmul.mubr.bf16.gmra.mxu0 %v440
    %v476 = vpop.f32.mrf.mxu0
    %v477 = vadd.f32 %v412, %v476
    %v478 = vpop.f32.mrf.mxu0
    %v479 = vpop.f32.mrf.mxu0
    %v480 = vadd.f32 %v412, %v479
    %v481 = vpop.f32.mrf.mxu0
    %482 = vdwg.mxu0
    %483 = vst [vmem:[#allocation2] sm:$0xff] %v477
    %484 = vst [vmem:[#allocation2 + $0x8] sm:$0xff] %v480
    // Predicated region
    $region18: #{tpu_custom_call.1} parent=1 // pred_check
      _
    $region19: #{tpu_custom_call.1} parent=1 // pred_check_branch
      %486 = sbr.rel (0) target = $region21
    $region20: #{tpu_custom_call.1} parent=1 // pred_region
      %s488 = ssub.s32 256, 256
      %489 = vsyncadd [#allocation3], %s488
      %s490 = sshll.u32 [#allocation2], 4
      %s491 = int_to_ptr.vmem [resolvable:$true] %s490
      %496 = dma.vmem_to_hbm [thread:$0]  %s491, 256, %s4, [#allocation3], 128, 128, 8
    $region21: #{tpu_custom_call.1} parent=1 // pred_fallthru
      _
    // Predicated region
    $region22: #{tpu_custom_call.1} parent=1 // pred_check
      _
    $region23: #{tpu_custom_call.1} parent=1 // pred_check_branch
      %498 = sbr.rel (0) target = $region25
    $region24: #{tpu_custom_call.1} parent=1 // pred_region
      %499 = dma.done [#allocation3], 256
    $region25: #{tpu_custom_call.1} parent=1 // pred_fallthru
      _
    %500 = vsyncpa [#allocation3], 1

</llo_original>
